<compile_context>
chip_gen: v7x
topology: tpu7x:2x2x1
jax: 0.10.0
libtpu: 0.0.40
codegen_flags: <defaults>
</compile_context>

<pallas_src>
import functools

import jax
import jax.numpy as jnp
from jax.experimental import pallas as pl
from jax.experimental.pallas import tpu as pltpu


def _tln_kernel(x_ref, w_ref, b_ref, o_ref, *, eps, inv_c, bf16_elementwise):
    # x_ref: (C, tile_T) -- channels on sublanes, time lane-dense.
    # w_ref / b_ref: (C, 1), broadcast over the lane (time) axis.
    x = x_ref[...]
    xf = x.astype(jnp.float32)

    # One-pass statistics in f32: both reductions are cross-sublane (XLU) and
    # no centered full-tile temporary is materialized.
    s1 = jnp.sum(xf, axis=0, keepdims=True)           # (1, tile_T)
    s2 = jnp.sum(xf * xf, axis=0, keepdims=True)      # (1, tile_T)
    mean = s1 * inv_c
    var = jnp.maximum(s2 * inv_c - mean * mean, 0.0)  # guard tiny cancellation
    inv = jax.lax.rsqrt(var + eps)                    # EUP rsqrt (free slot)

    col_scale = inv                                   # (1, tile_T)
    col_shift = mean * inv                            # (1, tile_T)

    if bf16_elementwise:
        # Stats in f32, normalize+affine in bf16 (2x elems/vreg on v6e/v7x).
        dt = x.dtype
        y = (x * col_scale.astype(dt) - col_shift.astype(dt)) * w_ref[...] + b_ref[...]
        o_ref[...] = y.astype(o_ref.dtype)
    else:
        y = (xf * col_scale - col_shift) * w_ref[...] + b_ref[...]
        o_ref[...] = y.astype(o_ref.dtype)


def _tpu_vmem_capacity_bytes(default=64 * 1024 * 1024):
    """Per-TensorCore VMEM capacity; conservative (v7x) fallback."""
    try:
        return int(pltpu.get_tpu_info().vmem_capacity_bytes)
    except Exception:
        return default


def _choose_tile_t(B, C, T, itemsize, vmem_cap_bytes):
    """Pick the lane (time) tile extent and the scoped VMEM limit.

    Per-column (per time step) VMEM cost charged against the budget:
      * x input tile : 2 buffers * C * itemsize
      * output tile  : 2 buffers * C * itemsize
      * f32 temps    : ~3 full tiles (x cast, x*x, y) * C * 4
    Plus a fixed cost for weight/bias, which lane-pad to (C, 128) f32 and are
    double-buffered (4 copies total).
    """
    vmem_limit = (3 * vmem_cap_bytes) // 4            # requested scoped limit
    tile_budget = (4 * vmem_limit) // 5               # ~80% of it for blocks
    fixed = 4 * C * 128 * 4                           # w + b padded, 2 bufs each
    per_col = 4 * C * itemsize + 3 * C * 4
    avail = tile_budget - fixed

    min_tile = 512 if itemsize < 4 else 256

    # Fail cleanly rather than via spills / Mosaic VMEM OOM.
    min_cols = min(T, 128)
    if avail < per_col * min_cols:
        raise ValueError(
            "TransposedLayerNorm Pallas kernel: channel dim C=%d is too large "
            "for the VMEM budget (%d bytes available, %d needed for the "
            "smallest legal tile); needs a split-C strategy."
            % (C, max(avail, 0), per_col * min_cols))

    # 1-2K lanes already sits on the HBM roofline; bigger tiles only cost VMEM.
    max_cols = min(avail // per_col, 2048)

    if T <= max_cols:
        tile_t = T                                    # full time axis, no tail
    else:
        tile_t = max((max_cols // 128) * 128, 128)
        # Prefer a tile that divides T exactly: every store is an unmasked,
        # full-lane vst (no masked tail step).
        for cand in range(tile_t, min(min_tile, tile_t) - 1, -128):
            if T % cand == 0:
                tile_t = cand
                break

    # Keep enough grid steps for the v7x two-TensorCore split and for the
    # double-buffered pipeline to reach steady state.
    min_steps = 8

    def _steps(tt):
        return B * (-(-T // tt))

    if _steps(tile_t) < min_steps and T > min_tile:
        tiles_needed = -(-min_steps // B)
        cand = max((T // tiles_needed // 128) * 128, min_tile)
        tile_t = min(tile_t, cand, T)

    # Best effort: even number of time tiles when B is odd (balanced TC split).
    if B % 2 == 1 and tile_t < T:
        n_tiles = -(-T // tile_t)
        if n_tiles % 2 == 1 and tile_t - 128 >= min_tile:
            cand = tile_t - 128
            if (-(-T // cand)) % 2 == 0:
                tile_t = cand

    return tile_t, vmem_limit


def transposed_layer_norm(x_bct, weight=None, bias=None, *, eps=1e-5):
    """Equivalent of TransposedLayerNorm.forward for x of shape [B, C, T]."""
    B, C, T = x_bct.shape

    bf16_fast = x_bct.dtype == jnp.bfloat16
    param_dtype = x_bct.dtype if bf16_fast else jnp.float32

    # Handle elementwise_affine=False (no learned weight/bias).
    if weight is None:
        weight = jnp.ones((C,), param_dtype)
    if bias is None:
        bias = jnp.zeros((C,), param_dtype)

    # Hoist the affine-parameter cast / layout out of the per-tile body.
    w2d = weight.astype(param_dtype).reshape(C, 1)
    b2d = bias.astype(param_dtype).reshape(C, 1)

    vmem_cap = _tpu_vmem_capacity_bytes()
    tile_t, vmem_limit = _choose_tile_t(B, C, T, x_bct.dtype.itemsize, vmem_cap)
    grid = (B, pl.cdiv(T, tile_t))   # ragged tail (if any) => masked stores;
                                     # normalization is strictly per-column so
                                     # garbage in padded lanes never escapes.

    kernel = functools.partial(
        _tln_kernel, eps=float(eps), inv_c=1.0 / C, bf16_elementwise=bf16_fast)

    return pl.pallas_call(
        kernel,
        out_shape=jax.ShapeDtypeStruct((B, C, T), x_bct.dtype),
        grid_spec=pltpu.PrefetchScalarGridSpec(
            num_scalar_prefetch=0,
            grid=grid,
            in_specs=[
                # (batch squeezed, full channel dim, lane-dense time tile)
                pl.BlockSpec((None, C, tile_t), lambda b, t: (b, 0, t)),
                pl.BlockSpec((C, 1), lambda b, t: (0, 0)),
                pl.BlockSpec((C, 1), lambda b, t: (0, 0)),
            ],
            out_specs=pl.BlockSpec((None, C, tile_t), lambda b, t: (b, 0, t)),
        ),
        compiler_params=pltpu.CompilerParams(
            dimension_semantics=("parallel", "parallel"),
            vmem_limit_bytes=vmem_limit,
        ),
    )(x_bct, w2d, b2d)


if __name__ == "__main__":
    key = jax.random.PRNGKey(0)
    kx, kw, kb = jax.random.split(key, 3)

    B, C, T = 2, 32, 16                                 # small [B, C, T] example
    x = jax.random.normal(kx, (B, C, T), dtype=jnp.float32)

    # Non-trivial "learned" LayerNorm(C) parameters to exercise the affine.
    weight = 1.0 + 0.1 * jax.random.normal(kw, (C,), dtype=jnp.float32)
    bias = 0.1 * jax.random.normal(kb, (C,), dtype=jnp.float32)

    y = transposed_layer_norm(x, weight, bias)
    y = jax.block_until_ready(y)

    # Pure-JAX reference (PyTorch LayerNorm over the channel dim).
    xt = jnp.transpose(x, (0, 2, 1))
    mean = jnp.mean(xt, axis=-1, keepdims=True)
    var = jnp.mean((xt - mean) ** 2, axis=-1, keepdims=True)
    ref = (xt - mean) * jax.lax.rsqrt(var + 1e-5) * weight + bias
    ref = jnp.transpose(ref, (0, 2, 1))

    assert y.shape == (B, C, T)
    assert jnp.allclose(y, ref, atol=1e-5, rtol=1e-5)
    print("KERNEL_OK")
</pallas_src>

<mosaic_0001>
module attributes {stable_mosaic.version = 11 : i64} {
  func.func @_tln_kernel(%arg0: i32, %arg1: i32, %arg2: memref<1x32x16xf32, #tpu.memory_space<vmem>>, %arg3: memref<32x1xf32, #tpu.memory_space<vmem>>, %arg4: memref<32x1xf32, #tpu.memory_space<vmem>>, %arg5: memref<1x32x16xf32, #tpu.memory_space<vmem>>) attributes {dimension_semantics = [#tpu.dimension_semantics<parallel>, #tpu.dimension_semantics<parallel>], iteration_bounds = array<i64: 2, 1>, scalar_prefetch = 0 : i64, scratch_operands = 0 : i64, tpu.core_type = #tpu.core_type<tc>, window_params = [{transform_indices = @transform_0, window_bounds = array<i64: 1, 32, 16>}, {pipeline_mode = #tpu.pipeline_mode<synchronous>, transform_indices = @transform_1, window_bounds = array<i64: 32, 1>}, {pipeline_mode = #tpu.pipeline_mode<synchronous>, transform_indices = @transform_2, window_bounds = array<i64: 32, 1>}, {transform_indices = @transform_3, window_bounds = array<i64: 1, 32, 16>}]} {
    %c0 = arith.constant 0 : index
    %c0_0 = arith.constant 0 : index
    %c0_1 = arith.constant 0 : index
    %0 = vector.load %arg2[%c0, %c0_0, %c0_1] : memref<1x32x16xf32, #tpu.memory_space<vmem>>, vector<1x32x16xf32>
    %1 = vector.shape_cast %0 : vector<1x32x16xf32> to vector<32x16xf32>
    %cst = arith.constant dense<0.000000e+00> : vector<16xf32>
    %2 = vector.multi_reduction <add>, %1, %cst [0] : vector<32x16xf32> to vector<16xf32>
    %3 = vector.shape_cast %2 : vector<16xf32> to vector<1x16xf32>
    %4 = arith.mulf %1, %1 : vector<32x16xf32>
    %cst_2 = arith.constant dense<0.000000e+00> : vector<16xf32>
    %5 = vector.multi_reduction <add>, %4, %cst_2 [0] : vector<32x16xf32> to vector<16xf32>
    %6 = vector.shape_cast %5 : vector<16xf32> to vector<1x16xf32>
    %cst_3 = arith.constant 3.125000e-02 : f32
    %7 = vector.broadcast %cst_3 : f32 to vector<1x16xf32>
    %8 = arith.mulf %3, %7 : vector<1x16xf32>
    %cst_4 = arith.constant 3.125000e-02 : f32
    %9 = vector.broadcast %cst_4 : f32 to vector<1x16xf32>
    %10 = arith.mulf %6, %9 : vector<1x16xf32>
    %11 = arith.mulf %8, %8 : vector<1x16xf32>
    %12 = arith.subf %10, %11 : vector<1x16xf32>
    %cst_5 = arith.constant 0.000000e+00 : f32
    %13 = vector.broadcast %cst_5 : f32 to vector<1x16xf32>
    %14 = arith.maximumf %12, %13 : vector<1x16xf32>
    %cst_6 = arith.constant 9.99999974E-6 : f32
    %15 = vector.broadcast %cst_6 : f32 to vector<1x16xf32>
    %16 = arith.addf %14, %15 : vector<1x16xf32>
    %17 = math.rsqrt %16 : vector<1x16xf32>
    %18 = arith.mulf %8, %17 : vector<1x16xf32>
    %19 = vector.broadcast %17 : vector<1x16xf32> to vector<32x16xf32>
    %20 = arith.mulf %1, %19 : vector<32x16xf32>
    %21 = vector.broadcast %18 : vector<1x16xf32> to vector<32x16xf32>
    %22 = arith.subf %20, %21 : vector<32x16xf32>
    %c0_7 = arith.constant 0 : index
    %c0_8 = arith.constant 0 : index
    %23 = vector.load %arg3[%c0_7, %c0_8] : memref<32x1xf32, #tpu.memory_space<vmem>>, vector<32x1xf32>
    %24 = vector.broadcast %23 : vector<32x1xf32> to vector<32x16xf32>
    %25 = arith.mulf %22, %24 : vector<32x16xf32>
    %c0_9 = arith.constant 0 : index
    %c0_10 = arith.constant 0 : index
    %26 = vector.load %arg4[%c0_9, %c0_10] : memref<32x1xf32, #tpu.memory_space<vmem>>, vector<32x1xf32>
    %27 = vector.broadcast %26 : vector<32x1xf32> to vector<32x16xf32>
    %28 = arith.addf %25, %27 : vector<32x16xf32>
    %c0_11 = arith.constant 0 : index
    %c0_12 = arith.constant 0 : index
    %c0_13 = arith.constant 0 : index
    %29 = vector.load %arg5[%c0_11, %c0_12, %c0_13] : memref<1x32x16xf32, #tpu.memory_space<vmem>>, vector<1x32x16xf32>
    %30 = vector.shape_cast %29 : vector<1x32x16xf32> to vector<32x16xf32>
    %31 = vector.shape_cast %28 : vector<32x16xf32> to vector<1x32x16xf32>
    tpu.vector_store %arg5[%c0_11, %c0_12, %c0_13], %31 {strides = array<i32>} : memref<1x32x16xf32, #tpu.memory_space<vmem>>, vector<1x32x16xf32>,
    return
  }
  func.func @transform_0(%arg0: i32, %arg1: i32) -> (i32, i32, i32) {
    %c0_i32 = arith.constant 0 : i32
    %c0_i32_0 = arith.constant 0 : i32
    return %arg0, %c0_i32, %arg1 : i32, i32, i32
  }
  func.func @transform_1(%arg0: i32, %arg1: i32) -> (i32, i32) {
    %c0_i32 = arith.constant 0 : i32
    %c0_i32_0 = arith.constant 0 : i32
    %c0_i32_1 = arith.constant 0 : i32
    return %c0_i32, %c0_i32_0 : i32, i32
  }
  func.func @transform_2(%arg0: i32, %arg1: i32) -> (i32, i32) {
    %c0_i32 = arith.constant 0 : i32
    %c0_i32_0 = arith.constant 0 : i32
    %c0_i32_1 = arith.constant 0 : i32
    return %c0_i32, %c0_i32_0 : i32, i32
  }
  func.func @transform_3(%arg0: i32, %arg1: i32) -> (i32, i32, i32) {
    %c0_i32 = arith.constant 0 : i32
    %c0_i32_0 = arith.constant 0 : i32
    return %arg0, %c0_i32, %arg1 : i32, i32, i32
  }
}

</mosaic_0001>

<llo_original>
// kernel: tpu_custom_call.1
$region0: #{tpu_custom_call.1}
  #allocation0 [shape = 'u32[]', space=smem, size = 0x4, offset = 0x4, fixed_abs, tag = 'smem constant byte address 0x4 - core index']
  #allocation1 [shape = 'u32[144,128]{1,0:T(1,128)}', space=vmem, size = 0x12000, scoped, tag = 'internal scratch']
  %s0 = inlined_call_operand.vmem [shape: f32[2,32,16], index: 0, kind: input, shape index: {}]
  %s1 = inlined_call_operand.vmem [shape: f32[32,1], index: 1, kind: input, shape index: {}]
  %s2 = inlined_call_operand.vmem [shape: f32[32,1], index: 2, kind: input, shape index: {}]
  %s3 = inlined_call_operand.vmem [shape: f32[2,32,16], index: 3, kind: output, shape index: {}]
  %s4 = sld [smem:[#allocation0]]
  $region45: #{tpu_custom_call.1} parent=0
    _
  %s6 = ssub.s32 1, %s4
  %s7 = scalar_select 0, %s6, %s4
  loop: start=0, step=1, limit=4
  $region2: #{tpu_custom_call.1} parent=0 // loop_pre_header
    _
  $region3: #{tpu_custom_call.1} parent=0 // loop_header
    %s9 = sphi 0, %s13
    %p10 = scmp.ge.s32.totalorder %s9, 4
    %s16 = sphi 0, %s28
    %s17 = sphi 0, %s24
    %s18 = sphi 0, %s16
    %s19 = sphi 0, %s17
    %s20 = sphi 0, %s18
    %s21 = sphi 0, %s19
    %s33 = sphi 0, %s35
    %s36 = sphi 0, %s33
    %s37 = sphi 0, %s36
    %s53 = sphi 0, %s37
    %s57 = sphi 0, %s57
    %s59 = sphi 0, %s57
    %s60 = sphi 0, %s59
    %s74 = sphi 0, %s60
    %s78 = sphi 0, %s78
    %s80 = sphi 0, %s78
    %s81 = sphi 0, %s80
    %s95 = sphi 0, %s81
    %s103 = sphi 0, %s105
    %s106 = sphi 0, %s103
    %s107 = sphi 0, %s106
    %s123 = sphi 0, %s107
  $region4: #{tpu_custom_call.1} parent=0 // loop_header_branch
    %12 = sbr.rel (%p10) target = $region8
  $region5: #{tpu_custom_call.1} parent=0 // loop_body
    %s14 = ssub.s32 %s9, 1
    %s15 = ssub.s32 %s9, 2
    %s22 = sadd.s32 1, %s17
    %p23 = scmp.ge.s32.totalorder %s22, 1
    %s24 = scalar_select %p23, 0, %s22
    %s25 = sadd.s32 1, %s16
    %s26 = scalar_select %p23, %s25, %s16
    %p27 = scmp.ge.s32.totalorder %s26, 2
    %s28 = scalar_select %p27, 0, %s26
    %s29 = ssub.s32 %s16, %s28
    %s30 = ssub.s32 %s17, %s24
    %s31 = sor.u32 %s29, %s30
    %p32 = scmp.eq.s32.totalorder %s31, 0
    %s34 = sadd.s32 %s33, 1
    %s35 = scalar_select %p32, %s33, %s34
    %p38 = pneg %p32
    %p39 = scmp.eq.s32.totalorder %s9, 1
    %p40 = por %p38, %p39
    %p41 = scmp.ne.s32.totalorder %s33, %s36
    %p42 = scmp.eq.s32.totalorder %s9, 0
    %p43 = por %p41, %p42
    %p44 = scmp.ne.s32.totalorder %s33, %s36
    %p45 = scmp.eq.s32.totalorder %s14, 1
    %p46 = por %p44, %p45
    %p47 = scmp.ne.s32.totalorder %s36, %s37
    %p48 = scmp.eq.s32.totalorder %s14, 0
    %p49 = por %p47, %p48
    %p50 = scmp.ne.s32.totalorder %s36, %s37
    %p51 = scmp.eq.s32.totalorder %s15, 1
    %p52 = por %p50, %p51
    %p54 = scmp.ne.s32.totalorder %s37, %s53
    %p55 = scmp.eq.s32.totalorder %s15, 0
    %p56 = por %p54, %p55
    %s58 = sadd.s32 %s57, 1
    %p61 = scmp.eq.s32.totalorder %s9, 1
    %p62 = scmp.ne.s32.totalorder %s57, %s59
    %p63 = scmp.eq.s32.totalorder %s9, 0
    %p64 = por %p62, %p63
    %p65 = scmp.ne.s32.totalorder %s57, %s59
    %p66 = scmp.eq.s32.totalorder %s14, 1
    %p67 = por %p65, %p66
    %p68 = scmp.ne.s32.totalorder %s59, %s60
    %p69 = scmp.eq.s32.totalorder %s14, 0
    %p70 = por %p68, %p69
    %p71 = scmp.ne.s32.totalorder %s59, %s60
    %p72 = scmp.eq.s32.totalorder %s15, 1
    %p73 = por %p71, %p72
    %p75 = scmp.ne.s32.totalorder %s60, %s74
    %p76 = scmp.eq.s32.totalorder %s15, 0
    %p77 = por %p75, %p76
    %s79 = sadd.s32 %s78, 1
    %p82 = scmp.eq.s32.totalorder %s9, 1
    %p83 = scmp.ne.s32.totalorder %s78, %s80
    %p84 = scmp.eq.s32.totalorder %s9, 0
    %p85 = por %p83, %p84
    %p86 = scmp.ne.s32.totalorder %s78, %s80
    %p87 = scmp.eq.s32.totalorder %s14, 1
    %p88 = por %p86, %p87
    %p89 = scmp.ne.s32.totalorder %s80, %s81
    %p90 = scmp.eq.s32.totalorder %s14, 0
    %p91 = por %p89, %p90
    %p92 = scmp.ne.s32.totalorder %s80, %s81
    %p93 = scmp.eq.s32.totalorder %s15, 1
    %p94 = por %p92, %p93
    %p96 = scmp.ne.s32.totalorder %s81, %s95
    %p97 = scmp.eq.s32.totalorder %s15, 0
    %p98 = por %p96, %p97
    %s99 = ssub.s32 %s16, %s28
    %s100 = ssub.s32 %s17, %s24
    %s101 = sor.u32 %s99, %s100
    %p102 = scmp.eq.s32.totalorder %s101, 0
    %s104 = sadd.s32 %s103, 1
    %s105 = scalar_select %p102, %s103, %s104
    %p108 = pneg %p102
    %p109 = scmp.eq.s32.totalorder %s9, 1
    %p110 = por %p108, %p109
    %p111 = scmp.ne.s32.totalorder %s103, %s106
    %p112 = scmp.eq.s32.totalorder %s9, 0
    %p113 = por %p111, %p112
    %p114 = scmp.ne.s32.totalorder %s103, %s106
    %p115 = scmp.eq.s32.totalorder %s14, 1
    %p116 = por %p114, %p115
    %p117 = scmp.ne.s32.totalorder %s106, %s107
    %p118 = scmp.eq.s32.totalorder %s14, 0
    %p119 = por %p117, %p118
    %p120 = scmp.ne.s32.totalorder %s106, %s107
    %p121 = scmp.eq.s32.totalorder %s15, 1
    %p122 = por %p120, %p121
    %p124 = scmp.ne.s32.totalorder %s107, %s123
    %p125 = scmp.eq.s32.totalorder %s15, 0
    %p126 = por %p124, %p125
    %p127 = scmp.le.s32.totalorder 1, %s9
    %p128 = scmp.lt.s32.totalorder %s9, 3
    %p129 = pnand %p127, %p128
    %p130 = pneg %p129
    // Predicated region
    $region9: #{tpu_custom_call.1} parent=5 // pred_check
      _
    $region10: #{tpu_custom_call.1} parent=5 // pred_check_branch
      %132 = sbr.rel (%p129) target = $region12
    $region11: #{tpu_custom_call.1} parent=5 // pred_region
      %s133 = ssub.s32 %s9, 1
      // Predicated region
      $region13: #{tpu_custom_call.1} parent=11 // pred_check
        %p134 = pneg %p70
      $region14: #{tpu_custom_call.1} parent=11 // pred_check_branch
        %136 = sbr.rel (%p134) target = $region16
      $region15: #{tpu_custom_call.1} parent=11 // pred_region
        _
      $region16: #{tpu_custom_call.1} parent=11 // pred_fallthru
        _
      // Predicated region
      $region17: #{tpu_custom_call.1} parent=11 // pred_check
        %p137 = pneg %p91
      $region18: #{tpu_custom_call.1} parent=11 // pred_check_branch
        %139 = sbr.rel (%p137) target = $region20
      $region19: #{tpu_custom_call.1} parent=11 // pred_region
        _
      $region20: #{tpu_custom_call.1} parent=11 // pred_fallthru
        _
    $region12: #{tpu_custom_call.1} parent=5 // pred_fallthru
      _
    %p140 = scmp.lt.s32.totalorder %s9, 2
    // Predicated region
    $region21: #{tpu_custom_call.1} parent=5 // pred_check
      %p141 = pneg %p140
    $region22: #{tpu_custom_call.1} parent=5 // pred_check_branch
      %143 = sbr.rel (%p141) target = $region24
    $region23: #{tpu_custom_call.1} parent=5 // pred_region
      // Predicated region
      $region25: #{tpu_custom_call.1} parent=23 // pred_check
        %p144 = pneg %p43
      $region26: #{tpu_custom_call.1} parent=23 // pred_check_branch
        %146 = sbr.rel (%p144) target = $region28
      $region27: #{tpu_custom_call.1} parent=23 // pred_region
        %p147 = scmp.lt.s32.totalorder %s16, 1
        %s148 = scalar_select %p147, %s16, 1
        %p149 = scmp.lt.s32.totalorder %s17, 0
        %s150 = scalar_select %p149, %s17, 0
        %s151 = smul.addr %s148, 4
        %s152 = sadd.s32 %s150, %s151
        %s153 = smul.addr %s152, 8
        %s154 = scalar_lea.vmem %s0, %s153
      $region28: #{tpu_custom_call.1} parent=23 // pred_fallthru
        _
    $region24: #{tpu_custom_call.1} parent=5 // pred_fallthru
      _
    %p155 = scmp.le.s32.totalorder 1, %s9
    %p156 = scmp.lt.s32.totalorder %s9, 3
    %p157 = pnand %p155, %p156
    %p158 = pneg %p157
    // Predicated region
    $region29: #{tpu_custom_call.1} parent=5 // pred_check
      _
    $region30: #{tpu_custom_call.1} parent=5 // pred_check_branch
      %160 = sbr.rel (%p157) target = $region32
    $region31: #{tpu_custom_call.1} parent=5 // pred_region
      %s161 = ssub.s32 %s9, 1
      %p162 = scmp.lt.s32.totalorder %s18, 1
      %s163 = scalar_select %p162, %s18, 1
      %p164 = scmp.lt.s32.totalorder %s19, 0
      %s165 = scalar_select %p164, %s19, 0
      %s166 = smul.addr %s163, 4
      %s167 = sadd.s32 %s165, %s166
      %s168 = smul.addr %s167, 8
      %s169 = scalar_lea.vmem %s0, %s168
      %p170 = pneg %p49
      %p171 = pneg %p46
      %p172 = pneg %p70
      %p173 = pneg %p67
      %p174 = pneg %p91
      %p175 = pneg %p88
      %p176 = pneg %p119
      %p177 = pneg %p116
      %p178 = scmp.lt.s32.totalorder %s18, 1
      %s179 = scalar_select %p178, %s18, 1
      %p180 = scmp.lt.s32.totalorder %s19, 0
      %s181 = scalar_select %p180, %s19, 0
      %s182 = smul.addr %s179, 4
      %s183 = sadd.s32 %s181, %s182
      %s184 = smul.addr %s183, 8
      %s185 = scalar_lea.vmem %s3, %s184
      %p186 = scmp.lt.s32.totalorder %s18, 1
      %s187 = scalar_select %p186, %s18, 1
      %p188 = scmp.lt.s32.totalorder %s19, 0
      %s189 = scalar_select %p188, %s19, 0
      %s190 = smul.addr %s187, 4
      %s191 = sadd.s32 %s189, %s190
      %s192 = smul.addr %s191, 8
      %s193 = scalar_lea.vmem %s0, %s192
      %p194 = scmp.lt.s32.totalorder %s18, 1
      %s195 = scalar_select %p194, %s18, 1
      %p196 = scmp.lt.s32.totalorder %s19, 0
      %s197 = scalar_select %p196, %s19, 0
      %s198 = smul.addr %s195, 4
      %s199 = sadd.s32 %s197, %s198
      %s200 = smul.addr %s199, 8
      %s201 = scalar_lea.vmem %s3, %s200
      %v202 = vld [vmem:[%s193] sm:$0xff]
      %v203 = vld [vmem:[%s193 + $0x8] sm:$0xff]
      %v204 = vld [vmem:[%s193 + $0x10] sm:$0xff]
      %v205 = vld [vmem:[%s193 + $0x18] sm:$0xff]
      %vm206 = vcmask 130048
      %v207 = vsel %vm206, %v202, 0.0
      %v208 = vsel %vm206, %v203, 0.0
      %v209 = vadd.f32 %v207, %v208
      %v210 = vsel %vm206, %v204, 0.0
      %v211 = vadd.f32 %v209, %v210
      %v212 = vsel %vm206, %v205, 0.0
      %v213 = vadd.f32 %v211, %v212
      %v214 = vrot.slane %v213, 4
      %v215 = vadd.f32 %v213, %v214
      %v216 = vrot.slane %v215, 2
      %v217 = vadd.f32 %v215, %v216
      %v218 = vrot.slane %v217, 1
      %v219 = vadd.f32 %v217, %v218
      %v220 = vmul.f32 %v202, %v202
      %v221 = vmul.f32 %v203, %v203
      %v222 = vmul.f32 %v204, %v204
      %v223 = vmul.f32 %v205, %v205
      %v224 = vsel %vm206, %v220, 0.0
      %v225 = vsel %vm206, %v221, 0.0
      %v226 = vadd.f32 %v224, %v225
      %v227 = vsel %vm206, %v222, 0.0
      %v228 = vadd.f32 %v226, %v227
      %v229 = vsel %vm206, %v223, 0.0
      %v230 = vadd.f32 %v228, %v229
      %v231 = vrot.slane %v230, 4
      %v232 = vadd.f32 %v230, %v231
      %v233 = vrot.slane %v232, 2
      %v234 = vadd.f32 %v232, %v233
      %v235 = vrot.slane %v234, 1
      %v236 = vadd.f32 %v234, %v235
      %v237 = vmul.f32 %v219, 0.03125
      %v238 = vmul.f32 %v236, 0.03125
      %v239 = vmul.f32 %v237, %v237
      %v240 = vsub.f32 %v238, %v239
      %v241 = vmax.f32 %v240, 0.0
      %v242 = vadd.f32 %v241, 1e-05
      %v243 = vrsqrt.pop %v242
      %v244 = vmul.f32 %v237, %v243
      %v245 = vmul.f32 %v202, %v243
      %v246 = vmul.f32 %v203, %v243
      %v247 = vmul.f32 %v204, %v243
      %v248 = vmul.f32 %v205, %v243
      %v249 = vsub.f32 %v245, %v244
      %v250 = vsub.f32 %v246, %v244
      %v251 = vsub.f32 %v247, %v244
      %v252 = vsub.f32 %v248, %v244
      %v253 = vld [vmem:[%s1] sm:$0xff]
      %v254 = vld [vmem:[%s1 + $0x8] sm:$0xff]
      %v255 = vld [vmem:[%s1 + $0x10] sm:$0xff]
      %v256 = vld [vmem:[%s1 + $0x18] sm:$0xff]
      %258 = vset.pattern.permute.xlu0 0
      %259 = vperm.xlu0 %258, %v253
      %v260 = vpop.permute.xlu0 %259
      %263 = vset.pattern.permute.xlu0 0
      %264 = vperm.xlu0 %263, %v254
      %v265 = vpop.permute.xlu0 %264
      %268 = vset.pattern.permute.xlu0 0
      %269 = vperm.xlu0 %268, %v255
      %v270 = vpop.permute.xlu0 %269
      %273 = vset.pattern.permute.xlu0 0
      %274 = vperm.xlu0 %273, %v256
      %v275 = vpop.permute.xlu0 %274
      %v277 = vmul.f32 %v249, %v260
      %v278 = vmul.f32 %v250, %v265
      %v279 = vmul.f32 %v251, %v270
      %v280 = vmul.f32 %v252, %v275
      %v281 = vld [vmem:[%s2] sm:$0xff]
      %v282 = vld [vmem:[%s2 + $0x8] sm:$0xff]
      %v283 = vld [vmem:[%s2 + $0x10] sm:$0xff]
      %v284 = vld [vmem:[%s2 + $0x18] sm:$0xff]
      %286 = vset.pattern.permute.xlu0 0
      %287 = vperm.xlu0 %286, %v281
      %v288 = vpop.permute.xlu0 %287
      %291 = vset.pattern.permute.xlu0 0
      %292 = vperm.xlu0 %291, %v282
      %v293 = vpop.permute.xlu0 %292
      %296 = vset.pattern.permute.xlu0 0
      %297 = vperm.xlu0 %296, %v283
      %v298 = vpop.permute.xlu0 %297
      %301 = vset.pattern.permute.xlu0 0
      %302 = vperm.xlu0 %301, %v284
      %v303 = vpop.permute.xlu0 %302
      %v305 = vadd.f32 %v277, %v288
      %v306 = vadd.f32 %v278, %v293
      %v307 = vadd.f32 %v279, %v298
      %v308 = vadd.f32 %v280, %v303
      %309 = vst.msk [vmem:[%s201] sm:$0xff] %vm206, %v305
      %310 = vst.msk [vmem:[%s201 + $0x8] sm:$0xff] %vm206, %v306
      %311 = vst.msk [vmem:[%s201 + $0x10] sm:$0xff] %vm206, %v307
      %312 = vst.msk [vmem:[%s201 + $0x18] sm:$0xff] %vm206, %v308
      %p313 = scmp.lt.s32.totalorder %s18, 1
      %s314 = scalar_select %p313, %s18, 1
      %p315 = scmp.lt.s32.totalorder %s19, 0
      %s316 = scalar_select %p315, %s19, 0
      %s317 = smul.addr %s314, 4
      %s318 = sadd.s32 %s316, %s317
      %s319 = smul.addr %s318, 8
      %s320 = scalar_lea.vmem %s3, %s319
      // Predicated region
      $region33: #{tpu_custom_call.1} parent=31 // pred_check
        %p321 = pneg %p116
      $region34: #{tpu_custom_call.1} parent=31 // pred_check_branch
        %323 = sbr.rel (%p321) target = $region36
      $region35: #{tpu_custom_call.1} parent=31 // pred_region
        _
      $region36: #{tpu_custom_call.1} parent=31 // pred_fallthru
        _
    $region32: #{tpu_custom_call.1} parent=5 // pred_fallthru
      _
    %p324 = scmp.le.s32.totalorder 2, %s9
    // Predicated region
    $region37: #{tpu_custom_call.1} parent=5 // pred_check
      %p325 = pneg %p324
    $region38: #{tpu_custom_call.1} parent=5 // pred_check_branch
      %327 = sbr.rel (%p325) target = $region40
    $region39: #{tpu_custom_call.1} parent=5 // pred_region
      %s328 = ssub.s32 %s9, 2
      // Predicated region
      $region41: #{tpu_custom_call.1} parent=39 // pred_check
        %p329 = pneg %p122
      $region42: #{tpu_custom_call.1} parent=39 // pred_check_branch
        %331 = sbr.rel (%p329) target = $region44
      $region43: #{tpu_custom_call.1} parent=39 // pred_region
        %p332 = scmp.lt.s32.totalorder %s20, 1
        %s333 = scalar_select %p332, %s20, 1
        %p334 = scmp.lt.s32.totalorder %s21, 0
        %s335 = scalar_select %p334, %s21, 0
        %s336 = smul.addr %s333, 4
        %s337 = sadd.s32 %s335, %s336
        %s338 = smul.addr %s337, 8
        %s339 = scalar_lea.vmem %s3, %s338
      $region44: #{tpu_custom_call.1} parent=39 // pred_fallthru
        _
    $region40: #{tpu_custom_call.1} parent=5 // pred_fallthru
      _
  $region6: #{tpu_custom_call.1} parent=0 // loop_footer
    %s13 = sadd.s32 1, %s9
  $region7: #{tpu_custom_call.1} parent=0 // loop_footer_branch
    %8 = sbr.rel target = $region3
  $region8: #{tpu_custom_call.1} parent=0 // loop_exit
    _

</llo_original>
